<compile_context>
chip_gen: v5e
topology: v5e:2x2
jax: 0.10.0
libtpu: 0.0.40
codegen_flags: <defaults>
</compile_context>

<pallas_src>
import math
from functools import partial

import jax
import jax.numpy as jnp
from jax.experimental import pallas as pl
from jax.experimental.pallas import tpu as pltpu


def dqn_kernel(x_ref, w1_ref, b1_ref, w2_ref, b2_ref, w3_ref, b3_ref, o_ref):
    # layer1 + ReLU: x and w1 stay f32 (tiny K = n_obs operand; avoids a
    # packed-sublane relayout on the narrow bf16 LHS and keeps layer 1 exact).
    h1 = jnp.dot(x_ref[...], w1_ref[...], preferred_element_type=jnp.float32)
    h1 = jnp.maximum(h1 + b1_ref[...], 0.0)
    # layer2 + ReLU: bf16 MXU operands, f32 accumulate, f32 epilogue.
    h2 = jnp.dot(h1.astype(jnp.bfloat16), w2_ref[...],
                 preferred_element_type=jnp.float32)
    h2 = jnp.maximum(h2 + b2_ref[...], 0.0)
    # layer3 (no activation); store bf16 to halve the HBM writeback.
    q = jnp.dot(h2.astype(jnp.bfloat16), w3_ref[...],
                preferred_element_type=jnp.float32) + b3_ref[...]
    o_ref[...] = q.astype(o_ref.dtype)


def _round_up(v, m):
    return ((v + m - 1) // m) * m


def _pad_to(a, shape):
    pads = [(0, t - s) for s, t in zip(a.shape, shape)]
    return jnp.pad(a, pads)


def prepare_dqn_params(params):
    """Pad + cast weights ONCE (hoisted out of the per-step path).

    w1/b1 stay f32 (layer-1 LHS is f32) and w1's input dim is left unpadded;
    w2/w3 are bf16 (MXU operands); all lane (output) dims are padded to 128.
    Biases are (1, out) f32.
    """
    w1, b1, w2, b2, w3, b3 = params
    n_obs, hidden = w1.shape
    n_actions = w3.shape[1]

    HID_P = max(128, _round_up(hidden, 128))
    OUT_P = max(128, _round_up(n_actions, 128))

    w1p = _pad_to(w1, (n_obs, HID_P)).astype(jnp.float32)
    b1p = _pad_to(b1.reshape(1, hidden), (1, HID_P)).astype(jnp.float32)
    w2p = _pad_to(w2, (HID_P, HID_P)).astype(jnp.bfloat16)
    b2p = _pad_to(b2.reshape(1, hidden), (1, HID_P)).astype(jnp.float32)
    w3p = _pad_to(w3, (HID_P, OUT_P)).astype(jnp.bfloat16)
    b3p = _pad_to(b3.reshape(1, n_actions), (1, OUT_P)).astype(jnp.float32)
    return (w1p, b1p, w2p, b2p, w3p, b3p)


@partial(jax.jit, static_argnames=("n_actions",))
def dqn_forward(x, padded_params, n_actions):
    """x: (B, n_obs) float32. Returns (B, n_actions) float32 Q-values."""
    w1p, b1p, w2p, b2p, w3p, b3p = padded_params
    B, n_obs = x.shape
    HID_P = w1p.shape[1]
    OUT_P = w3p.shape[1]

    x = x.astype(jnp.float32)

    if B <= 256:
        # Latency-bound policy path: full-array block (no batch/feature pad,
        # no cast), single grid step. Block dims equal to the full array dims
        # are legal even when < (8, 128).
        TB, BP = B, B
        xp = x
    else:
        # Replay-minibatch path: 256-1024 row tiles amortize per-grid-step
        # overhead; keep the grid length >= 2 so v7x's two TensorCores both
        # get work via the parallel grid axis.
        TB = min(1024, max(256, _round_up((B + 1) // 2, 256)))
        BP = _round_up(B, TB)
        xp = x if BP == B else jnp.pad(x, ((0, BP - B), (0, 0)))
    grid = (BP // TB,)

    flops = 2 * BP * (n_obs * HID_P + HID_P * HID_P + HID_P * OUT_P)
    bytes_accessed = (
        xp.size * 4                                   # x (f32 in)
        + w1p.size * 4 + (w2p.size + w3p.size) * 2    # weights (f32 / bf16)
        + (b1p.size + b2p.size + b3p.size) * 4        # biases (f32)
        + BP * OUT_P * 2                              # output (bf16)
    )

    out = pl.pallas_call(
        dqn_kernel,
        out_shape=jax.ShapeDtypeStruct((BP, OUT_P), jnp.bfloat16),
        grid=grid,
        in_specs=[
            pl.BlockSpec((TB, n_obs), lambda i: (i, 0)),      # x: tiled over batch
            pl.BlockSpec((n_obs, HID_P), lambda i: (0, 0)),   # weights/biases stay
            pl.BlockSpec((1, HID_P), lambda i: (0, 0)),       # VMEM-resident (constant
            pl.BlockSpec((HID_P, HID_P), lambda i: (0, 0)),   # block index -> no re-DMA)
            pl.BlockSpec((1, HID_P), lambda i: (0, 0)),
            pl.BlockSpec((HID_P, OUT_P), lambda i: (0, 0)),
            pl.BlockSpec((1, OUT_P), lambda i: (0, 0)),
        ],
        out_specs=pl.BlockSpec((TB, OUT_P), lambda i: (i, 0)),
        compiler_params=pltpu.CompilerParams(
            dimension_semantics=("parallel",)),
        cost_estimate=pl.CostEstimate(
            flops=flops, transcendentals=0, bytes_accessed=bytes_accessed),
    )(xp, w1p, b1p, w2p, b2p, w3p, b3p)

    # Slice off lane/batch padding; convert back to f32 (fuses with the slice).
    # TODO(synk): for DQN targets, fuse the per-row max / Q(s,a) gather into
    # the kernel to avoid materializing the padded Q matrix at all.
    return out[:B, :n_actions].astype(jnp.float32)


def init_dqn_params(key, n_observations, n_actions, hidden=128):
    """PyTorch-style nn.Linear init: U(-1/sqrt(fan_in), 1/sqrt(fan_in)).
    Weights are stored transposed as (in_features, out_features)."""
    keys = jax.random.split(key, 6)

    def linear(kw, kb, fan_in, fan_out):
        bound = 1.0 / math.sqrt(fan_in)
        w = jax.random.uniform(kw, (fan_in, fan_out), jnp.float32, -bound, bound)
        b = jax.random.uniform(kb, (fan_out,), jnp.float32, -bound, bound)
        return w, b

    w1, b1 = linear(keys[0], keys[1], n_observations, hidden)
    w2, b2 = linear(keys[2], keys[3], hidden, hidden)
    w3, b3 = linear(keys[4], keys[5], hidden, n_actions)
    return (w1, b1, w2, b2, w3, b3)


def dqn_reference(x, params):
    w1, b1, w2, b2, w3, b3 = params
    h1 = jnp.maximum(x @ w1 + b1, 0.0)
    h2 = jnp.maximum(h1 @ w2 + b2, 0.0)
    return h2 @ w3 + b3


if __name__ == "__main__":
    # CartPole-v1: n_observations = 4, n_actions = 2.
    n_observations, n_actions, batch = 4, 2, 2

    key = jax.random.PRNGKey(0)
    k_params, k_x, k_xb = jax.random.split(key, 3)
    params = init_dqn_params(k_params, n_observations, n_actions)
    padded_params = prepare_dqn_params(params)  # pad/cast once, outside the step

    # Small (policy-action) batch: no wrapper-side pad/cast, single block.
    x = jax.random.normal(k_x, (batch, n_observations), jnp.float32)
    out = jax.block_until_ready(dqn_forward(x, padded_params, n_actions))
    ref = dqn_reference(x, params)
    assert out.shape == (batch, n_actions)
    # bf16 MXU operands / bf16 output (f32 accumulate) -> relaxed tolerance.
    assert jnp.allclose(out, ref, atol=5e-2, rtol=5e-2), "mismatch vs JAX reference (small batch)"

    # Replay-minibatch-sized batch exercises the tiled / parallel-grid path.
    xb = jax.random.normal(k_xb, (512, n_observations), jnp.float32)
    outb = jax.block_until_ready(dqn_forward(xb, padded_params, n_actions))
    refb = dqn_reference(xb, params)
    assert outb.shape == (512, n_actions)
    assert jnp.allclose(outb, refb, atol=5e-2, rtol=5e-2), "mismatch vs JAX reference (large batch)"

    print("KERNEL_OK")
</pallas_src>

<mosaic_0001>
module attributes {stable_mosaic.version = 11 : i64} {
  func.func @dqn_kernel(%arg0: i32, %arg1: memref<2x4xf32, #tpu.memory_space<vmem>>, %arg2: memref<4x128xf32, #tpu.memory_space<vmem>>, %arg3: memref<1x128xf32, #tpu.memory_space<vmem>>, %arg4: memref<128x128xbf16, #tpu.memory_space<vmem>>, %arg5: memref<1x128xf32, #tpu.memory_space<vmem>>, %arg6: memref<128x128xbf16, #tpu.memory_space<vmem>>, %arg7: memref<1x128xf32, #tpu.memory_space<vmem>>, %arg8: memref<2x128xbf16, #tpu.memory_space<vmem>>) attributes {dimension_semantics = [#tpu.dimension_semantics<parallel>], iteration_bounds = array<i64: 1>, scalar_prefetch = 0 : i64, scratch_operands = 0 : i64, tpu.core_type = #tpu.core_type<tc>, window_params = [{transform_indices = @transform_0, window_bounds = array<i64: 2, 4>}, {pipeline_mode = #tpu.pipeline_mode<synchronous>, transform_indices = @transform_1, window_bounds = array<i64: 4, 128>}, {pipeline_mode = #tpu.pipeline_mode<synchronous>, transform_indices = @transform_2, window_bounds = array<i64: 1, 128>}, {pipeline_mode = #tpu.pipeline_mode<synchronous>, transform_indices = @transform_3, window_bounds = array<i64: 128, 128>}, {pipeline_mode = #tpu.pipeline_mode<synchronous>, transform_indices = @transform_4, window_bounds = array<i64: 1, 128>}, {pipeline_mode = #tpu.pipeline_mode<synchronous>, transform_indices = @transform_5, window_bounds = array<i64: 128, 128>}, {pipeline_mode = #tpu.pipeline_mode<synchronous>, transform_indices = @transform_6, window_bounds = array<i64: 1, 128>}, {transform_indices = @transform_7, window_bounds = array<i64: 2, 128>}]} {
    %c0 = arith.constant 0 : index
    %c0_0 = arith.constant 0 : index
    %0 = vector.load %arg1[%c0, %c0_0] : memref<2x4xf32, #tpu.memory_space<vmem>>, vector<2x4xf32>
    %c0_1 = arith.constant 0 : index
    %c0_2 = arith.constant 0 : index
    %1 = vector.load %arg2[%c0_1, %c0_2] : memref<4x128xf32, #tpu.memory_space<vmem>>, vector<4x128xf32>
    %cst = arith.constant dense<0.000000e+00> : vector<2x128xf32>
    %2 = tpu.matmul %0, %1, %cst {dimension_numbers = #tpu.dot_dimension_numbers<[1], [0], [0], [1], [0, 0, 1, 1], [], []>} : vector<2x4xf32>, vector<4x128xf32>, vector<2x128xf32> -> vector<2x128xf32>
    %c0_3 = arith.constant 0 : index
    %c0_4 = arith.constant 0 : index
    %3 = vector.load %arg3[%c0_3, %c0_4] : memref<1x128xf32, #tpu.memory_space<vmem>>, vector<1x128xf32>
    %4 = vector.broadcast %3 : vector<1x128xf32> to vector<2x128xf32>
    %5 = arith.addf %2, %4 : vector<2x128xf32>
    %cst_5 = arith.constant 0.000000e+00 : f32
    %6 = vector.broadcast %cst_5 : f32 to vector<2x128xf32>
    %7 = arith.maximumf %5, %6 : vector<2x128xf32>
    %8 = arith.truncf %7 : vector<2x128xf32> to vector<2x128xbf16>
    %c0_6 = arith.constant 0 : index
    %c0_7 = arith.constant 0 : index
    %9 = vector.load %arg4[%c0_6, %c0_7] : memref<128x128xbf16, #tpu.memory_space<vmem>>, vector<128x128xbf16>
    %cst_8 = arith.constant dense<0.000000e+00> : vector<2x128xf32>
    %10 = tpu.matmul %8, %9, %cst_8 {dimension_numbers = #tpu.dot_dimension_numbers<[1], [0], [0], [1], [0, 0, 1, 1], [], []>} : vector<2x128xbf16>, vector<128x128xbf16>, vector<2x128xf32> -> vector<2x128xf32>
    %c0_9 = arith.constant 0 : index
    %c0_10 = arith.constant 0 : index
    %11 = vector.load %arg5[%c0_9, %c0_10] : memref<1x128xf32, #tpu.memory_space<vmem>>, vector<1x128xf32>
    %12 = vector.broadcast %11 : vector<1x128xf32> to vector<2x128xf32>
    %13 = arith.addf %10, %12 : vector<2x128xf32>
    %cst_11 = arith.constant 0.000000e+00 : f32
    %14 = vector.broadcast %cst_11 : f32 to vector<2x128xf32>
    %15 = arith.maximumf %13, %14 : vector<2x128xf32>
    %16 = arith.truncf %15 : vector<2x128xf32> to vector<2x128xbf16>
    %c0_12 = arith.constant 0 : index
    %c0_13 = arith.constant 0 : index
    %17 = vector.load %arg6[%c0_12, %c0_13] : memref<128x128xbf16, #tpu.memory_space<vmem>>, vector<128x128xbf16>
    %cst_14 = arith.constant dense<0.000000e+00> : vector<2x128xf32>
    %18 = tpu.matmul %16, %17, %cst_14 {dimension_numbers = #tpu.dot_dimension_numbers<[1], [0], [0], [1], [0, 0, 1, 1], [], []>} : vector<2x128xbf16>, vector<128x128xbf16>, vector<2x128xf32> -> vector<2x128xf32>
    %c0_15 = arith.constant 0 : index
    %c0_16 = arith.constant 0 : index
    %19 = vector.load %arg7[%c0_15, %c0_16] : memref<1x128xf32, #tpu.memory_space<vmem>>, vector<1x128xf32>
    %20 = vector.broadcast %19 : vector<1x128xf32> to vector<2x128xf32>
    %21 = arith.addf %18, %20 : vector<2x128xf32>
    %22 = arith.truncf %21 : vector<2x128xf32> to vector<2x128xbf16>
    %c0_17 = arith.constant 0 : index
    %c0_18 = arith.constant 0 : index
    %23 = vector.load %arg8[%c0_17, %c0_18] : memref<2x128xbf16, #tpu.memory_space<vmem>>, vector<2x128xbf16>
    tpu.vector_store %arg8[%c0_17, %c0_18], %22 {strides = array<i32>} : memref<2x128xbf16, #tpu.memory_space<vmem>>, vector<2x128xbf16>,
    return
  }
  func.func @transform_0(%arg0: i32) -> (i32, i32) {
    %c0_i32 = arith.constant 0 : i32
    %c0_i32_0 = arith.constant 0 : i32
    return %arg0, %c0_i32 : i32, i32
  }
  func.func @transform_1(%arg0: i32) -> (i32, i32) {
    %c0_i32 = arith.constant 0 : i32
    %c0_i32_0 = arith.constant 0 : i32
    %c0_i32_1 = arith.constant 0 : i32
    return %c0_i32, %c0_i32_0 : i32, i32
  }
  func.func @transform_2(%arg0: i32) -> (i32, i32) {
    %c0_i32 = arith.constant 0 : i32
    %c0_i32_0 = arith.constant 0 : i32
    %c0_i32_1 = arith.constant 0 : i32
    return %c0_i32, %c0_i32_0 : i32, i32
  }
  func.func @transform_3(%arg0: i32) -> (i32, i32) {
    %c0_i32 = arith.constant 0 : i32
    %c0_i32_0 = arith.constant 0 : i32
    %c0_i32_1 = arith.constant 0 : i32
    return %c0_i32, %c0_i32_0 : i32, i32
  }
  func.func @transform_4(%arg0: i32) -> (i32, i32) {
    %c0_i32 = arith.constant 0 : i32
    %c0_i32_0 = arith.constant 0 : i32
    %c0_i32_1 = arith.constant 0 : i32
    return %c0_i32, %c0_i32_0 : i32, i32
  }
  func.func @transform_5(%arg0: i32) -> (i32, i32) {
    %c0_i32 = arith.constant 0 : i32
    %c0_i32_0 = arith.constant 0 : i32
    %c0_i32_1 = arith.constant 0 : i32
    return %c0_i32, %c0_i32_0 : i32, i32
  }
  func.func @transform_6(%arg0: i32) -> (i32, i32) {
    %c0_i32 = arith.constant 0 : i32
    %c0_i32_0 = arith.constant 0 : i32
    %c0_i32_1 = arith.constant 0 : i32
    return %c0_i32, %c0_i32_0 : i32, i32
  }
  func.func @transform_7(%arg0: i32) -> (i32, i32) {
    %c0_i32 = arith.constant 0 : i32
    %c0_i32_0 = arith.constant 0 : i32
    return %arg0, %c0_i32 : i32, i32
  }
}

</mosaic_0001>

<llo_original>
// kernel: dqn_forward.1
$region0: #{dqn_forward.1}
  #allocation0 [shape = 'u32[]', space=smem, size = 0x4, offset = 0x4, fixed_abs, tag = 'smem constant byte address 0x4 - core index']
  #allocation1 [shape = 'u32[72,128]{1,0:T(1,128)}', space=vmem, size = 0x9000, scoped, tag = 'internal scratch']
  %s0 = inlined_call_operand.hbm [shape: f32[2,4], index: 0, kind: input, shape index: {}]
  %s1 = inlined_call_operand.hbm [shape: f32[4,128], index: 1, kind: input, shape index: {}]
  %s2 = inlined_call_operand.vmem [shape: f32[1,128], index: 2, kind: input, shape index: {}]
  %s3 = inlined_call_operand.hbm [shape: bf16[128,128], index: 3, kind: input, shape index: {}]
  %s4 = inlined_call_operand.vmem [shape: f32[1,128], index: 4, kind: input, shape index: {}]
  %s5 = inlined_call_operand.hbm [shape: bf16[128,128], index: 5, kind: input, shape index: {}]
  %s6 = inlined_call_operand.vmem [shape: f32[1,128], index: 6, kind: input, shape index: {}]
  %s7 = inlined_call_operand.vmem [shape: bf16[2,128], index: 7, kind: output, shape index: {}]
  %s8 = sld [smem:[#allocation0]]
  $region54: #{dqn_forward.1} parent=0
    _
  %s10 = ssub.s32 1, %s8
  %s11 = scalar_select 0, %s10, %s8
  $region1: #{dqn_forward.1} parent=0
    #allocation2 [shape = 'u8[1024]{0}', space=vmem, size = 0x400, scoped, tag = 'input window, operand 0, single buffered']
    #allocation3 [shape = 's32[1]{0}', space=sflag, size = 0x4, scoped, tag = 'scoped memory for dqn_forward.1']
    #allocation4 [shape = 'u8[2048]{0}', space=vmem, size = 0x800, scoped, tag = 'input window, operand 1, single buffered']
    #allocation5 [shape = 's32[1]{0}', space=sflag, size = 0x4, scoped, tag = 'scoped memory for dqn_forward.1']
    #allocation6 [shape = 'u8[32768]{0}', space=vmem, size = 0x8000, scoped, tag = 'input window, operand 3, single buffered']
    #allocation7 [shape = 'u8[32768]{0}', space=vmem, size = 0x8000, scoped, tag = 'input window, operand 5, single buffered']
    #allocation8 [shape = 's32[1]{0}', space=sflag, size = 0x4, scoped, tag = 'scoped memory for dqn_forward.1']
    %12 = vsyncpa [#allocation3], 0
    %13 = vsyncpa [#allocation5], 0
    %14 = vsyncpa [#allocation8], 0
    // Predicated region
    $region2: #{dqn_forward.1} parent=1 // pred_check
      _
    $region3: #{dqn_forward.1} parent=1 // pred_check_branch
      %16 = sbr.rel (0) target = $region5
    $region4: #{dqn_forward.1} parent=1 // pred_region
      %18 = vsyncadd [#allocation3], 0
      %s20 = sshll.u32 %s0, 4
      %s21 = int_to_ptr.hbm [resolvable:$true] %s20
      %s22 = sshll.u32 [#allocation2], 4
      %s23 = int_to_ptr.vmem [resolvable:$true] %s22
      %25 = dma.hbm_to_vmem [thread:$0]  %s21, 32, %s23, [#allocation3]
    $region5: #{dqn_forward.1} parent=1 // pred_fallthru
      _
    // Predicated region
    $region6: #{dqn_forward.1} parent=1 // pred_check
      _
    $region7: #{dqn_forward.1} parent=1 // pred_check_branch
      %27 = sbr.rel (0) target = $region9
    $region8: #{dqn_forward.1} parent=1 // pred_region
      %29 = vsyncadd [#allocation5], 0
      %s31 = sshll.u32 %s1, 4
      %s32 = int_to_ptr.hbm [resolvable:$true] %s31
      %s33 = sshll.u32 [#allocation4], 4
      %s34 = int_to_ptr.vmem [resolvable:$true] %s33
      %36 = dma.hbm_to_vmem [thread:$0]  %s32, 64, %s34, [#allocation5]
    $region9: #{dqn_forward.1} parent=1 // pred_fallthru
      _
    // Predicated region
    $region10: #{dqn_forward.1} parent=1 // pred_check
      _
    $region11: #{dqn_forward.1} parent=1 // pred_check_branch
      %38 = sbr.rel (0) target = $region13
    $region12: #{dqn_forward.1} parent=1 // pred_region
      _
    $region13: #{dqn_forward.1} parent=1 // pred_fallthru
      _
    // Predicated region
    $region14: #{dqn_forward.1} parent=1 // pred_check
      _
    $region15: #{dqn_forward.1} parent=1 // pred_check_branch
      %40 = sbr.rel (0) target = $region17
    $region16: #{dqn_forward.1} parent=1 // pred_region
      %42 = vsyncadd [#allocation5], 0
      %s43 = sshll.u32 %s3, 4
      %s44 = int_to_ptr.hbm [resolvable:$true] %s43
      %s45 = sshll.u32 [#allocation6], 4
      %s46 = int_to_ptr.vmem [resolvable:$true] %s45
      %51 = dma.hbm_to_vmem [thread:$0]  %s44, 1024, %s46, [#allocation5], 64, 64, 4
    $region17: #{dqn_forward.1} parent=1 // pred_fallthru
      _
    // Predicated region
    $region18: #{dqn_forward.1} parent=1 // pred_check
      _
    $region19: #{dqn_forward.1} parent=1 // pred_check_branch
      %53 = sbr.rel (0) target = $region21
    $region20: #{dqn_forward.1} parent=1 // pred_region
      _
    $region21: #{dqn_forward.1} parent=1 // pred_fallthru
      _
    // Predicated region
    $region22: #{dqn_forward.1} parent=1 // pred_check
      _
    $region23: #{dqn_forward.1} parent=1 // pred_check_branch
      %55 = sbr.rel (0) target = $region25
    $region24: #{dqn_forward.1} parent=1 // pred_region
      %57 = vsyncadd [#allocation8], 0
      %s58 = sshll.u32 %s5, 4
      %s59 = int_to_ptr.hbm [resolvable:$true] %s58
      %s60 = sshll.u32 [#allocation7], 4
      %s61 = int_to_ptr.vmem [resolvable:$true] %s60
      %66 = dma.hbm_to_vmem [thread:$0]  %s59, 1024, %s61, [#allocation8], 64, 64, 4
    $region25: #{dqn_forward.1} parent=1 // pred_fallthru
      _
    // Predicated region
    $region26: #{dqn_forward.1} parent=1 // pred_check
      _
    $region27: #{dqn_forward.1} parent=1 // pred_check_branch
      %68 = sbr.rel (0) target = $region29
    $region28: #{dqn_forward.1} parent=1 // pred_region
      _
    $region29: #{dqn_forward.1} parent=1 // pred_fallthru
      _
    // Predicated region
    $region30: #{dqn_forward.1} parent=1 // pred_check
      _
    $region31: #{dqn_forward.1} parent=1 // pred_check_branch
      %70 = sbr.rel (0) target = $region33
    $region32: #{dqn_forward.1} parent=1 // pred_region
      %72 = dma.done [#allocation3], 32
    $region33: #{dqn_forward.1} parent=1 // pred_fallthru
      _
    // Predicated region
    $region34: #{dqn_forward.1} parent=1 // pred_check
      _
    $region35: #{dqn_forward.1} parent=1 // pred_check_branch
      %74 = sbr.rel (0) target = $region37
    $region36: #{dqn_forward.1} parent=1 // pred_region
      %76 = dma.done [#allocation5], 64
    $region37: #{dqn_forward.1} parent=1 // pred_fallthru
      _
    // Predicated region
    $region38: #{dqn_forward.1} parent=1 // pred_check
      _
    $region39: #{dqn_forward.1} parent=1 // pred_check_branch
      %78 = sbr.rel (0) target = $region41
    $region40: #{dqn_forward.1} parent=1 // pred_region
      %80 = dma.done [#allocation5], 1024
    $region41: #{dqn_forward.1} parent=1 // pred_fallthru
      _
    // Predicated region
    $region42: #{dqn_forward.1} parent=1 // pred_check
      _
    $region43: #{dqn_forward.1} parent=1 // pred_check_branch
      %82 = sbr.rel (0) target = $region45
    $region44: #{dqn_forward.1} parent=1 // pred_region
      %84 = dma.done [#allocation8], 1024
    $region45: #{dqn_forward.1} parent=1 // pred_fallthru
      _
    %v85 = vld [vmem:[#allocation2] sm:$0x3]
    %v86 = vld [vmem:[#allocation4] sm:$0xf]
    %v87 = vld [vmem:[%s2] sm:$0x1]
    %v89 = vperm.slane %v87, 0
    %vm91 = vcmask 31744
    %v93 = vsel %vm91, %v85, 0
    %vm95 = vcmask 1043456
    %v97 = vsel %vm95, %v86, 0
    %99 = vmatpush.msra.mxu0 0.0
    %100 = vmatpush.msra.mxu0 0.0
    %101 = vmatpush.msra.mxu0 0.0
    %102 = vmatpush.msra.mxu0 0.0
    %103 = vmatpush.msra.mxu0 0.0
    %104 = vmatpush.msra.mxu0 0.0
    %105 = vmatpush.msra.mxu0 0.0
    %106 = vmatpush.msra.mxu0 0.0
    %107 = vmatpush.msra.mxu0 0.0
    %108 = vmatpush.msra.mxu0 0.0
    %109 = vmatpush.msra.mxu0 0.0
    %110 = vmatpush.msra.mxu0 0.0
    %111 = vmatpush.msra.mxu0 0.0
    %112 = vmatpush.msra.mxu0 0.0
    %113 = vmatpush.msra.mxu0 0.0
    %114 = vmatpush.msra.mxu0 %v97
    %115 = vmatmul.f32.gmra.mxu0 %v93
    %v116 = vpop.f32.mrf.mxu0
    %v117 = vadd.f32 %v89, %v116
    %118 = vdwg.mxu0
    %v119 = vmax.f32 %v117, 0.0
    %v120 = vpack.c.bf16 %v119, %v119
    %v121 = vld [vmem:[#allocation6] sm:$0xf]
    %v122 = vld [vmem:[#allocation6 + $0x4] sm:$0xf]
    %v123 = vld [vmem:[#allocation6 + $0x8] sm:$0xf]
    %v124 = vld [vmem:[#allocation6 + $0xc] sm:$0xf]
    %v125 = vld [vmem:[#allocation6 + $0x10] sm:$0xf]
    %v126 = vld [vmem:[#allocation6 + $0x14] sm:$0xf]
    %v127 = vld [vmem:[#allocation6 + $0x18] sm:$0xf]
    %v128 = vld [vmem:[#allocation6 + $0x1c] sm:$0xf]
    %v129 = vld [vmem:[#allocation6 + $0x20] sm:$0xf]
    %v130 = vld [vmem:[#allocation6 + $0x24] sm:$0xf]
    %v131 = vld [vmem:[#allocation6 + $0x28] sm:$0xf]
    %v132 = vld [vmem:[#allocation6 + $0x2c] sm:$0xf]
    %v133 = vld [vmem:[#allocation6 + $0x30] sm:$0xf]
    %v134 = vld [vmem:[#allocation6 + $0x34] sm:$0xf]
    %v135 = vld [vmem:[#allocation6 + $0x38] sm:$0xf]
    %v136 = vld [vmem:[#allocation6 + $0x3c] sm:$0xf]
    %v137 = vld [vmem:[%s4] sm:$0x1]
    %v139 = vperm.slane %v137, 0
    %v157 = vunpack.c.l.b16 %v121
    %v158 = vunpack.c.l.b16 %v122
    %v159 = vunpack.c.l.b16 %v123
    %v160 = vunpack.c.l.b16 %v124
    %v161 = vunpack.c.l.b16 %v125
    %v162 = vunpack.c.l.b16 %v126
    %v163 = vunpack.c.l.b16 %v127
    %v164 = vunpack.c.l.b16 %v128
    %v165 = vunpack.c.l.b16 %v129
    %v166 = vunpack.c.l.b16 %v130
    %v167 = vunpack.c.l.b16 %v131
    %v168 = vunpack.c.l.b16 %v132
    %v169 = vunpack.c.l.b16 %v133
    %v170 = vunpack.c.l.b16 %v134
    %v171 = vunpack.c.l.b16 %v135
    %v172 = vunpack.c.l.b16 %v136
    %v173 = vpack.c.b16 %v158, %v157
    %v174 = vpack.c.b16 %v160, %v159
    %v175 = vpack.c.b16 %v162, %v161
    %v176 = vpack.c.b16 %v164, %v163
    %v177 = vpack.c.b16 %v166, %v165
    %v178 = vpack.c.b16 %v168, %v167
    %v179 = vpack.c.b16 %v170, %v169
    %v180 = vpack.c.b16 %v172, %v171
    %189 = vmatpush.bf16.msra.mxu0 %v180
    %190 = vmatpush.bf16.msra.mxu0 %v179
    %191 = vmatpush.bf16.msra.mxu0 %v178
    %192 = vmatpush.bf16.msra.mxu0 %v177
    %193 = vmatpush.bf16.msra.mxu0 %v176
    %194 = vmatpush.bf16.msra.mxu0 %v175
    %195 = vmatpush.bf16.msra.mxu0 %v174
    %196 = vmatpush.bf16.msra.mxu0 %v173
    %197 = vmatmul.bf16.gmra.mxu0 %v120
    %v198 = vpop.f32.mrf.mxu0
    %v199 = vadd.f32 %v139, %v198
    %v200 = vpop.f32.mrf.mxu0
    %201 = vdwg.mxu0
    %v202 = vmax.f32 %v199, 0.0
    %v203 = vpack.c.bf16 %v202, %v202
    %v204 = vld [vmem:[#allocation7] sm:$0xf]
    %v205 = vld [vmem:[#allocation7 + $0x4] sm:$0xf]
    %v206 = vld [vmem:[#allocation7 + $0x8] sm:$0xf]
    %v207 = vld [vmem:[#allocation7 + $0xc] sm:$0xf]
    %v208 = vld [vmem:[#allocation7 + $0x10] sm:$0xf]
    %v209 = vld [vmem:[#allocation7 + $0x14] sm:$0xf]
    %v210 = vld [vmem:[#allocation7 + $0x18] sm:$0xf]
    %v211 = vld [vmem:[#allocation7 + $0x1c] sm:$0xf]
    %v212 = vld [vmem:[#allocation7 + $0x20] sm:$0xf]
    %v213 = vld [vmem:[#allocation7 + $0x24] sm:$0xf]
    %v214 = vld [vmem:[#allocation7 + $0x28] sm:$0xf]
    %v215 = vld [vmem:[#allocation7 + $0x2c] sm:$0xf]
    %v216 = vld [vmem:[#allocation7 + $0x30] sm:$0xf]
    %v217 = vld [vmem:[#allocation7 + $0x34] sm:$0xf]
    %v218 = vld [vmem:[#allocation7 + $0x38] sm:$0xf]
    %v219 = vld [vmem:[#allocation7 + $0x3c] sm:$0xf]
    %v220 = vld [vmem:[%s6] sm:$0x1]
    %v222 = vperm.slane %v220, 0
    %v240 = vunpack.c.l.b16 %v204
    %v241 = vunpack.c.l.b16 %v205
    %v242 = vunpack.c.l.b16 %v206
    %v243 = vunpack.c.l.b16 %v207
    %v244 = vunpack.c.l.b16 %v208
    %v245 = vunpack.c.l.b16 %v209
    %v246 = vunpack.c.l.b16 %v210
    %v247 = vunpack.c.l.b16 %v211
    %v248 = vunpack.c.l.b16 %v212
    %v249 = vunpack.c.l.b16 %v213
    %v250 = vunpack.c.l.b16 %v214
    %v251 = vunpack.c.l.b16 %v215
    %v252 = vunpack.c.l.b16 %v216
    %v253 = vunpack.c.l.b16 %v217
    %v254 = vunpack.c.l.b16 %v218
    %v255 = vunpack.c.l.b16 %v219
    %v256 = vpack.c.b16 %v241, %v240
    %v257 = vpack.c.b16 %v243, %v242
    %v258 = vpack.c.b16 %v245, %v244
    %v259 = vpack.c.b16 %v247, %v246
    %v260 = vpack.c.b16 %v249, %v248
    %v261 = vpack.c.b16 %v251, %v250
    %v262 = vpack.c.b16 %v253, %v252
    %v263 = vpack.c.b16 %v255, %v254
    %272 = vmatpush.bf16.msra.mxu0 %v263
    %273 = vmatpush.bf16.msra.mxu0 %v262
    %274 = vmatpush.bf16.msra.mxu0 %v261
    %275 = vmatpush.bf16.msra.mxu0 %v260
    %276 = vmatpush.bf16.msra.mxu0 %v259
    %277 = vmatpush.bf16.msra.mxu0 %v258
    %278 = vmatpush.bf16.msra.mxu0 %v257
    %279 = vmatpush.bf16.msra.mxu0 %v256
    %280 = vmatmul.bf16.gmra.mxu0 %v203
    %v281 = vpop.f32.mrf.mxu0
    %v282 = vadd.f32 %v222, %v281
    %v283 = vpop.f32.mrf.mxu0
    %284 = vdwg.mxu0
    %v285 = vpack.c.bf16 %v282, %v282
    %286 = vst [vmem:[%s7] sm:$0x1] %v285
    // Predicated region
    $region46: #{dqn_forward.1} parent=1 // pred_check
      _
    $region47: #{dqn_forward.1} parent=1 // pred_check_branch
      %288 = sbr.rel (0) target = $region49
    $region48: #{dqn_forward.1} parent=1 // pred_region
      _
    $region49: #{dqn_forward.1} parent=1 // pred_fallthru
      _
    // Predicated region
    $region50: #{dqn_forward.1} parent=1 // pred_check
      _
    $region51: #{dqn_forward.1} parent=1 // pred_check_branch
      %290 = sbr.rel (0) target = $region53
    $region52: #{dqn_forward.1} parent=1 // pred_region
      _
    $region53: #{dqn_forward.1} parent=1 // pred_fallthru
      _
    %291 = vsyncpa [#allocation3], 1
    %292 = vsyncpa [#allocation5], 1
    %293 = vsyncpa [#allocation8], 1

</llo_original>
